<compile_context>
chip_gen: v5e
topology: v5e:2x2
jax: 0.10.0
libtpu: 0.0.40
codegen_flags: <defaults>
</compile_context>

<pallas_src>
import functools

import jax
import jax.numpy as jnp
from jax.experimental import pallas as pl
from jax.experimental.pallas import tpu as pltpu

_LANE = 128
_VMEM_TILE_BUDGET = 32 * 1024 * 1024  # bytes budgeted for pipelined tiles + f32 temps
_VMEM_LIMIT_BYTES = 48 * 1024 * 1024  # scoped VMEM limit (< 64 MiB physical on v7x)
_MAX_ROW_BLOCK = 1024                 # 512-1024 rows already sits on the HBM roofline plateau


def _round_up(a: int, b: int) -> int:
    return (a + b - 1) // b * b


def _sublane_pack(dtype) -> int:
    # Sub-32-bit dtypes pack along sublanes: 8 rows/vreg for 4B, 16 for 2B, 32 for 1B.
    return {4: 8, 2: 16, 1: 32}.get(jnp.dtype(dtype).itemsize, 8)


def _rmsnorm_kernel(x_ref, scale_ref, o_ref, *, num_features: int, eps: float, approx: bool):
    # Compute in f32 for the reduction, cast back on store.
    x = x_ref[...].astype(jnp.float32)          # [tm, Fp]
    scale = scale_ref[...].astype(jnp.float32)  # [1,  Fp]
    # Padded feature columns are zero, so they do not perturb the sum of squares.
    norm_x = jnp.sqrt(jnp.sum(x * x, axis=-1, keepdims=True))   # [tm, 1]
    rms_x = norm_x * (float(num_features) ** -0.5)
    # eps is added to the RMS (matches the torch module), not under the sqrt.
    denom = rms_x + eps
    if approx:
        # Offload the per-row divide to the (otherwise idle) EUP slot.
        x_normed = x * pl.reciprocal(denom, approx=True)
    else:
        x_normed = x / denom
    o_ref[...] = (scale * x_normed).astype(o_ref.dtype)


def rmsnorm(x: jax.Array, scale: jax.Array, eps: float = 1e-8, *,
            row_block: int | None = None, approx_reciprocal: bool = False):
    """RMSNorm over the last dim of x. scale has shape (num_features,)."""
    orig_shape = x.shape
    num_features = orig_shape[-1]
    rows = 1
    for d in orig_shape[:-1]:
        rows *= d

    # Lane-dense feature width (avoids masked partial stores when F < 128 or F % 128 != 0).
    fp = _round_up(num_features, _LANE)

    xb = jnp.dtype(x.dtype).itemsize
    pack = _sublane_pack(x.dtype)

    if row_block is None:
        # Per-row VMEM footprint: double-buffered input + output tiles plus the f32
        # working set the kernel materializes (cast, square, normalized product).
        per_row = 2 * fp * xb + 2 * fp * xb + 3 * fp * 4
        tm = max(pack, (_VMEM_TILE_BUDGET // per_row) // pack * pack)
        tm = min(tm, _MAX_ROW_BLOCK)
    else:
        tm = max(pack, _round_up(row_block, pack))
    tm = min(tm, _round_up(rows, pack))

    rows_p = _round_up(rows, tm)

    x2 = x.reshape(rows, num_features)
    scale2 = scale.reshape(1, num_features)
    if rows_p != rows or fp != num_features:
        x2 = jnp.pad(x2, ((0, rows_p - rows), (0, fp - num_features)))
    if fp != num_features:
        scale2 = jnp.pad(scale2, ((0, 0), (0, fp - num_features)))

    kernel = functools.partial(
        _rmsnorm_kernel, num_features=num_features, eps=eps, approx=approx_reciprocal)

    out = pl.pallas_call(
        kernel,
        out_shape=jax.ShapeDtypeStruct((rows_p, fp), x.dtype),
        grid_spec=pltpu.PrefetchScalarGridSpec(
            num_scalar_prefetch=0,
            grid=(rows_p // tm,),
            in_specs=[
                pl.BlockSpec((tm, fp), lambda i: (i, 0)),
                pl.BlockSpec((1, fp), lambda i: (0, 0)),
            ],
            out_specs=pl.BlockSpec((tm, fp), lambda i: (i, 0)),
        ),
        compiler_params=pltpu.CompilerParams(
            dimension_semantics=("parallel",),   # shards the row grid across TCs on v7x
            vmem_limit_bytes=_VMEM_LIMIT_BYTES,
        ),
    )(x2, scale2)

    if rows_p != rows or fp != num_features:
        out = out[:rows, :num_features]
    return out.reshape(orig_shape)


def rmsnorm_ref(x, scale, eps=1e-8):
    num_features = x.shape[-1]
    norm_x = jnp.linalg.norm(x.astype(jnp.float32), ord=2, axis=-1, keepdims=True)
    rms_x = norm_x * (num_features ** -0.5)
    return (scale * (x / (rms_x + eps))).astype(x.dtype)


if __name__ == "__main__":
    key = jax.random.PRNGKey(0)

    # Shapes implied by the module's forward: [..., num_features].
    batch, seq, hidden = 2, 8, 32
    x = jax.random.normal(key, (batch, seq, hidden), dtype=jnp.float32)
    # Deterministic parameter init matching nn.Parameter(torch.ones(num_features)).
    scale = jnp.ones((hidden,), dtype=jnp.float32)

    out = rmsnorm(x, scale, eps=1e-8)
    out = jax.block_until_ready(out)
    ref = rmsnorm_ref(x, scale, eps=1e-8)
    assert out.shape == x.shape
    assert jnp.allclose(out, ref, atol=1e-5, rtol=1e-5), "mismatch vs reference (main shape)"

    # Exercise the padding paths: odd row count and a feature dim that is not a
    # multiple of 128 (pads to 256 lanes), plus a non-trivial scale.
    k1, k2 = jax.random.split(key)
    x2 = jax.random.normal(k1, (3, 5, 160), dtype=jnp.float32)
    s2 = 1.0 + 0.1 * jax.random.normal(k2, (160,), dtype=jnp.float32)
    out2 = jax.block_until_ready(rmsnorm(x2, s2, eps=1e-8))
    ref2 = rmsnorm_ref(x2, s2, eps=1e-8)
    assert out2.shape == x2.shape
    assert jnp.allclose(out2, ref2, atol=1e-5, rtol=1e-5), "mismatch vs reference (padded shape)"

    print("KERNEL_OK")
</pallas_src>

<mosaic_0001>
module attributes {stable_mosaic.version = 11 : i64} {
  func.func @_rmsnorm_kernel(%arg0: i32, %arg1: memref<16x128xf32, #tpu.memory_space<vmem>>, %arg2: memref<1x128xf32, #tpu.memory_space<vmem>>, %arg3: memref<16x128xf32, #tpu.memory_space<vmem>>) attributes {dimension_semantics = [#tpu.dimension_semantics<parallel>], iteration_bounds = array<i64: 1>, scalar_prefetch = 0 : i64, scratch_operands = 0 : i64, tpu.core_type = #tpu.core_type<tc>, window_params = [{transform_indices = @transform_0, window_bounds = array<i64: 16, 128>}, {pipeline_mode = #tpu.pipeline_mode<synchronous>, transform_indices = @transform_1, window_bounds = array<i64: 1, 128>}, {transform_indices = @transform_2, window_bounds = array<i64: 16, 128>}]} {
    %c0 = arith.constant 0 : index
    %c0_0 = arith.constant 0 : index
    %0 = vector.load %arg1[%c0, %c0_0] : memref<16x128xf32, #tpu.memory_space<vmem>>, vector<16x128xf32>
    %c0_1 = arith.constant 0 : index
    %c0_2 = arith.constant 0 : index
    %1 = vector.load %arg2[%c0_1, %c0_2] : memref<1x128xf32, #tpu.memory_space<vmem>>, vector<1x128xf32>
    %2 = arith.mulf %0, %0 : vector<16x128xf32>
    %cst = arith.constant dense<0.000000e+00> : vector<16xf32>
    %3 = vector.multi_reduction <add>, %2, %cst [1] : vector<16x128xf32> to vector<16xf32>
    %4 = vector.shape_cast %3 : vector<16xf32> to vector<16x1xf32>
    %5 = math.sqrt %4 : vector<16x1xf32>
    %cst_3 = arith.constant 0.176776692 : f32
    %6 = vector.broadcast %cst_3 : f32 to vector<16x1xf32>
    %7 = arith.mulf %5, %6 : vector<16x1xf32>
    %cst_4 = arith.constant 9.99999993E-9 : f32
    %8 = vector.broadcast %cst_4 : f32 to vector<16x1xf32>
    %9 = arith.addf %7, %8 : vector<16x1xf32>
    %10 = vector.broadcast %9 : vector<16x1xf32> to vector<16x128xf32>
    %11 = arith.divf %0, %10 : vector<16x128xf32>
    %12 = vector.broadcast %1 : vector<1x128xf32> to vector<16x128xf32>
    %13 = arith.mulf %12, %11 : vector<16x128xf32>
    %c0_5 = arith.constant 0 : index
    %c0_6 = arith.constant 0 : index
    %14 = vector.load %arg3[%c0_5, %c0_6] : memref<16x128xf32, #tpu.memory_space<vmem>>, vector<16x128xf32>
    tpu.vector_store %arg3[%c0_5, %c0_6], %13 {strides = array<i32>} : memref<16x128xf32, #tpu.memory_space<vmem>>, vector<16x128xf32>,
    return
  }
  func.func @transform_0(%arg0: i32) -> (i32, i32) {
    %c0_i32 = arith.constant 0 : i32
    %c0_i32_0 = arith.constant 0 : i32
    return %arg0, %c0_i32 : i32, i32
  }
  func.func @transform_1(%arg0: i32) -> (i32, i32) {
    %c0_i32 = arith.constant 0 : i32
    %c0_i32_0 = arith.constant 0 : i32
    %c0_i32_1 = arith.constant 0 : i32
    return %c0_i32, %c0_i32_0 : i32, i32
  }
  func.func @transform_2(%arg0: i32) -> (i32, i32) {
    %c0_i32 = arith.constant 0 : i32
    %c0_i32_0 = arith.constant 0 : i32
    return %arg0, %c0_i32 : i32, i32
  }
}

</mosaic_0001>

<llo_original>
// kernel: tpu_custom_call.1
$region0: #{tpu_custom_call.1}
  #allocation0 [shape = 'u32[]', space=smem, size = 0x4, offset = 0x4, fixed_abs, tag = 'smem constant byte address 0x4 - core index']
  #allocation1 [shape = 'u32[72,128]{1,0:T(1,128)}', space=vmem, size = 0x9000, scoped, tag = 'internal scratch']
  %s0 = inlined_call_operand.hbm [shape: f32[16,128], index: 0, kind: input, shape index: {}]
  %s1 = inlined_call_operand.hbm [shape: f32[1,128], index: 1, kind: input, shape index: {}]
  %s2 = inlined_call_operand.hbm [shape: f32[16,128], index: 2, kind: output, shape index: {}]
  %s3 = sld [smem:[#allocation0]]
  $region26: #{tpu_custom_call.1} parent=0
    _
  %s5 = ssub.s32 1, %s3
  %s6 = scalar_select 0, %s5, %s3
  $region1: #{tpu_custom_call.1} parent=0
    #allocation2 [shape = 'u8[8192]{0}', space=vmem, size = 0x2000, scoped, tag = 'input window, operand 0, single buffered']
    #allocation3 [shape = 's32[1]{0}', space=sflag, size = 0x4, scoped, tag = 'scoped memory for tpu_custom_call.1']
    #allocation4 [shape = 's32[1]{0}', space=sflag, size = 0x4, scoped, tag = 'scoped memory for tpu_custom_call.1']
    #allocation5 [shape = 'u8[512]{0}', space=vmem, size = 0x400, scoped, tag = 'input window, operand 1, single buffered']
    #allocation6 [shape = 's32[1]{0}', space=sflag, size = 0x4, scoped, tag = 'scoped memory for tpu_custom_call.1']
    #allocation7 [shape = 'u8[8192]{0}', space=vmem, size = 0x2000, scoped, tag = 'output window, operand 0, single buffered']
    %7 = vsyncpa [#allocation3], 0
    %8 = vsyncpa [#allocation6], 0
    %9 = vsyncpa [#allocation4], 0
    // Predicated region
    $region2: #{tpu_custom_call.1} parent=1 // pred_check
      _
    $region3: #{tpu_custom_call.1} parent=1 // pred_check_branch
      %11 = sbr.rel (0) target = $region5
    $region4: #{tpu_custom_call.1} parent=1 // pred_region
      %13 = vsyncadd [#allocation3], 0
      %s14 = sshll.u32 %s0, 4
      %s15 = int_to_ptr.hbm [resolvable:$true] %s14
      %s16 = sshll.u32 [#allocation2], 4
      %s17 = int_to_ptr.vmem [resolvable:$true] %s16
      %22 = dma.hbm_to_vmem [thread:$0]  %s15, 256, %s17, [#allocation3], 128, 128, 8
    $region5: #{tpu_custom_call.1} parent=1 // pred_fallthru
      _
    // Predicated region
    $region6: #{tpu_custom_call.1} parent=1 // pred_check
      _
    $region7: #{tpu_custom_call.1} parent=1 // pred_check_branch
      %24 = sbr.rel (0) target = $region9
    $region8: #{tpu_custom_call.1} parent=1 // pred_region
      %26 = vsyncadd [#allocation6], 0
      %s28 = sshll.u32 %s1, 4
      %s29 = int_to_ptr.hbm [resolvable:$true] %s28
      %s30 = sshll.u32 [#allocation5], 4
      %s31 = int_to_ptr.vmem [resolvable:$true] %s30
      %33 = dma.hbm_to_vmem [thread:$0]  %s29, 16, %s31, [#allocation6]
    $region9: #{tpu_custom_call.1} parent=1 // pred_fallthru
      _
    // Predicated region
    $region10: #{tpu_custom_call.1} parent=1 // pred_check
      _
    $region11: #{tpu_custom_call.1} parent=1 // pred_check_branch
      %35 = sbr.rel (0) target = $region13
    $region12: #{tpu_custom_call.1} parent=1 // pred_region
      %37 = dma.done [#allocation3], 256
    $region13: #{tpu_custom_call.1} parent=1 // pred_fallthru
      _
    // Predicated region
    $region14: #{tpu_custom_call.1} parent=1 // pred_check
      _
    $region15: #{tpu_custom_call.1} parent=1 // pred_check_branch
      %39 = sbr.rel (0) target = $region17
    $region16: #{tpu_custom_call.1} parent=1 // pred_region
      %41 = dma.done [#allocation6], 16
    $region17: #{tpu_custom_call.1} parent=1 // pred_fallthru
      _
    %v42 = vld [vmem:[#allocation2] sm:$0xff]
    %v43 = vld [vmem:[#allocation2 + $0x8] sm:$0xff]
    %v44 = vld [vmem:[#allocation5] sm:$0x1]
    %v45 = vmul.f32 %v42, %v42
    %v46 = vmul.f32 %v43, %v43
    %47 = vadd.xlane.f32.xlu0 %v45
    %v48 = vpop.xlane.xlu0 %47
    %49 = vadd.xlane.f32.xlu0 %v46
    %v50 = vpop.xlane.xlu0 %49
    %v51 = vrsqrt.pop %v48
    %v52 = vmul.f32 %v51, %v48
    %v53 = vmul.f32 %v52, %v51
    %v54 = vmul.f32 0.5, %v53
    %v55 = vsub.f32 1.5, %v54
    %v56 = vmul.f32 %v51, %v55
    %v57 = vmul.f32 %v48, %v56
    %vm58 = vcmp.eq.f32.partialorder %v48, inf
    %v59 = vsel %vm58, %v48, %v57
    %vm60 = vcmp.eq.f32.partialorder %v48, 0.0
    %v61 = vand.u32 %v48, 2147483648
    %v62 = vsel %vm60, %v61, %v59
    %v63 = vrsqrt.pop %v50
    %v64 = vmul.f32 %v63, %v50
    %v65 = vmul.f32 %v64, %v63
    %v66 = vmul.f32 0.5, %v65
    %v67 = vsub.f32 1.5, %v66
    %v68 = vmul.f32 %v63, %v67
    %v69 = vmul.f32 %v50, %v68
    %vm70 = vcmp.eq.f32.partialorder %v50, inf
    %v71 = vsel %vm70, %v50, %v69
    %vm72 = vcmp.eq.f32.partialorder %v50, 0.0
    %v73 = vand.u32 %v50, 2147483648
    %v74 = vsel %vm72, %v73, %v71
    %v75 = vmul.f32 %v62, 0.17677669
    %v76 = vmul.f32 %v74, 0.17677669
    %v77 = vadd.f32 %v75, 1e-08
    %v78 = vadd.f32 %v76, 1e-08
    %v79 = vrcp.pop %v77
    %v80 = vmul.f32 %v77, %v79
    %v81 = vsub.f32 1.0, %v80
    %v82 = vmul.f32 %v79, %v81
    %v83 = vadd.f32 %v79, %v82
    %vm84 = vweird.f32 %v77
    %vm85 = vweird.f32 %v79
    %vm86 = vmor %vm84, %vm85
    %v87 = vsel %vm86, %v79, %v83
    %v88 = vand.u32 2147483647, %v77
    %vm89 = vcmp.eq.f32.partialorder %v88, 8.507059e+37
    %v90 = vand.u32 %v77, 2147483648
    %v91 = vor.u32 1.1754944e-38, %v90
    %v92 = vsel %vm89, %v91, %v87
    %v93 = vmul.f32 %v42, %v92
    %v94 = vrcp.pop %v78
    %v95 = vmul.f32 %v78, %v94
    %v96 = vsub.f32 1.0, %v95
    %v97 = vmul.f32 %v94, %v96
    %v98 = vadd.f32 %v94, %v97
    %vm99 = vweird.f32 %v78
    %vm100 = vweird.f32 %v94
    %vm101 = vmor %vm99, %vm100
    %v102 = vsel %vm101, %v94, %v98
    %v103 = vand.u32 2147483647, %v78
    %vm104 = vcmp.eq.f32.partialorder %v103, 8.507059e+37
    %v105 = vand.u32 %v78, 2147483648
    %v106 = vor.u32 1.1754944e-38, %v105
    %v107 = vsel %vm104, %v106, %v102
    %v108 = vmul.f32 %v43, %v107
    %v110 = vperm.slane %v44, 0
    %v112 = vmul.f32 %v110, %v93
    %v113 = vmul.f32 %v110, %v108
    %114 = vst [vmem:[#allocation7] sm:$0xff] %v112
    %115 = vst [vmem:[#allocation7 + $0x8] sm:$0xff] %v113
    // Predicated region
    $region18: #{tpu_custom_call.1} parent=1 // pred_check
      _
    $region19: #{tpu_custom_call.1} parent=1 // pred_check_branch
      %117 = sbr.rel (0) target = $region21
    $region20: #{tpu_custom_call.1} parent=1 // pred_region
      %119 = vsyncadd [#allocation4], 0
      %s120 = sshll.u32 [#allocation7], 4
      %s121 = int_to_ptr.vmem [resolvable:$true] %s120
      %s122 = sshll.u32 %s2, 4
      %s123 = int_to_ptr.hbm [resolvable:$true] %s122
      %128 = dma.vmem_to_hbm [thread:$0]  %s121, 256, %s123, [#allocation4], 128, 128, 8
    $region21: #{tpu_custom_call.1} parent=1 // pred_fallthru
      _
    // Predicated region
    $region22: #{tpu_custom_call.1} parent=1 // pred_check
      _
    $region23: #{tpu_custom_call.1} parent=1 // pred_check_branch
      %130 = sbr.rel (0) target = $region25
    $region24: #{tpu_custom_call.1} parent=1 // pred_region
      %132 = dma.done [#allocation4], 256
    $region25: #{tpu_custom_call.1} parent=1 // pred_fallthru
      _
    %133 = vsyncpa [#allocation3], 1
    %134 = vsyncpa [#allocation6], 1
    %135 = vsyncpa [#allocation4], 1

</llo_original>
